<compile_context>
chip_gen: v5e
topology: v5e:2x2
jax: 0.10.0
libtpu: 0.0.40
codegen_flags: <defaults>
</compile_context>

<pallas_src>
import jax
import jax.numpy as jnp
from jax import lax
from jax.experimental import pallas as pl
from jax.experimental.pallas import tpu as pltpu

EPS = 1e-5


def _conv1x1_vpu(x, w, b):
    """1x1 conv as VPU broadcast multiply-adds (no MXU for tiny C).

    x: (N, C_in, HW) lane-dense activations
    w: (C_out, C_in) Conv2d weight (kernel_size=1, squeezed)
    b: (C_out, 1)    Conv2d bias
    returns (N, C_out, HW):  out[n, o, s] = b[o] + sum_i w[o, i] * x[n, i, s]
    """
    c_in = x.shape[1]
    acc = b[None, :, :] + w[None, :, 0:1] * x[:, 0:1, :]
    for i in range(1, c_in):
        acc = acc + w[None, :, i:i + 1] * x[:, i:i + 1, :]
    return acc


def _instance_norm(h):
    """InstanceNorm2d(affine=False): per-(n, c) stats over the HW (lane) axis.

    Single pass: sum and sum-of-squares; biased variance clamped at 0.
    """
    inv_hw = 1.0 / h.shape[-1]
    s1 = jnp.sum(h, axis=-1, keepdims=True)
    s2 = jnp.sum(h * h, axis=-1, keepdims=True)
    mean = s1 * inv_hw
    var = jnp.maximum(s2 * inv_hw - mean * mean, 0.0)
    return (h - mean) * lax.rsqrt(var + EPS)


def residual_block_kernel(x_ref, w1_ref, b1_ref, w2_ref, b2_ref, o_ref):
    x = x_ref[...]          # (N, C, HW) float32, lane-dense
    w1 = w1_ref[...]        # (C, C)  [out, in]
    b1 = b1_ref[...]        # (C, 1)
    w2 = w2_ref[...]        # (C, C)
    b2 = b2_ref[...]        # (C, 1)

    # Conv1x1 #1 -> InstanceNorm -> ReLU
    h = _conv1x1_vpu(x, w1, b1)
    h = _instance_norm(h)
    h = jnp.maximum(h, 0.0)

    # Conv1x1 #2 -> InstanceNorm
    h = _conv1x1_vpu(h, w2, b2)
    h = _instance_norm(h)

    # Residual add
    o_ref[...] = x + h


def residual_block(x_nchw, w1, b1, w2, b2):
    """x_nchw: (N, C, H, W) float32.  w*: (C, C), b*: (C,)."""
    N, C, H, W = x_nchw.shape
    HW = H * W

    # NCHW -> (N, C, HW): contiguous reshape, no HBM transpose.
    x = x_nchw.reshape(N, C, HW)
    b1_2d = b1.reshape(C, 1)
    b2_2d = b2.reshape(C, 1)

    cost = pl.CostEstimate(
        flops=2 * 2 * N * HW * C * C + 12 * N * C * HW,   # convs + norm/relu/add
        transcendentals=2 * N * C,                        # rsqrt per (n, c)
        bytes_accessed=2 * N * C * HW * 4 + 2 * (C * C + C) * 4,
    )

    out = pl.pallas_call(
        residual_block_kernel,
        out_shape=jax.ShapeDtypeStruct((N, C, HW), jnp.float32),
        grid=(1,),
        in_specs=[
            pl.BlockSpec((N, C, HW), lambda i: (0, 0, 0)),   # x (whole batch)
            pl.BlockSpec((C, C), lambda i: (0, 0)),          # w1
            pl.BlockSpec((C, 1), lambda i: (0, 0)),          # b1
            pl.BlockSpec((C, C), lambda i: (0, 0)),          # w2
            pl.BlockSpec((C, 1), lambda i: (0, 0)),          # b2
        ],
        out_specs=pl.BlockSpec((N, C, HW), lambda i: (0, 0, 0)),
        compiler_params=pltpu.CompilerParams(
            dimension_semantics=("arbitrary",)),
        cost_estimate=cost,
    )(x, w1, b1_2d, w2, b2_2d)

    # (N, C, HW) -> NCHW: contiguous reshape, free.
    return out.reshape(N, C, H, W)


if __name__ == "__main__":
    key = jax.random.PRNGKey(0)
    k_x, k_w1, k_b1, k_w2, k_b2 = jax.random.split(key, 5)

    N, C, H, W = 2, 4, 16, 16

    x = jax.random.normal(k_x, (N, C, H, W), dtype=jnp.float32)
    # Deterministic synthetic parameters (shapes match nn.Conv2d(C, C, 1)).
    fan_in = float(C)  # kernel_size = 1
    bound = 1.0 / (fan_in ** 0.5)
    w1 = jax.random.uniform(k_w1, (C, C), jnp.float32, -bound, bound)
    b1 = jax.random.uniform(k_b1, (C,), jnp.float32, -bound, bound)
    w2 = jax.random.uniform(k_w2, (C, C), jnp.float32, -bound, bound)
    b2 = jax.random.uniform(k_b2, (C,), jnp.float32, -bound, bound)

    y = residual_block(x, w1, b1, w2, b2)
    jax.block_until_ready(y)

    # Pure-JAX reference for a sanity check (matches PyTorch semantics).
    def ref(x, w1, b1, w2, b2):
        h = jnp.einsum("nchw,oc->nohw", x, w1) + b1[None, :, None, None]
        m = h.mean(axis=(2, 3), keepdims=True)
        v = ((h - m) ** 2).mean(axis=(2, 3), keepdims=True)
        h = (h - m) * lax.rsqrt(v + EPS)
        h = jnp.maximum(h, 0.0)
        h = jnp.einsum("nchw,oc->nohw", h, w2) + b2[None, :, None, None]
        m = h.mean(axis=(2, 3), keepdims=True)
        v = ((h - m) ** 2).mean(axis=(2, 3), keepdims=True)
        h = (h - m) * lax.rsqrt(v + EPS)
        return x + h

    y_ref = ref(x, w1, b1, w2, b2)
    assert jnp.allclose(y, y_ref, atol=1e-4, rtol=1e-4), (
        float(jnp.max(jnp.abs(y - y_ref))))

    print("KERNEL_OK")
</pallas_src>

<mosaic_0001>
module attributes {stable_mosaic.version = 11 : i64} {
  func.func @residual_block_kernel(%arg0: i32, %arg1: memref<2x4x256xf32, #tpu.memory_space<vmem>>, %arg2: memref<4x4xf32, #tpu.memory_space<vmem>>, %arg3: memref<4x1xf32, #tpu.memory_space<vmem>>, %arg4: memref<4x4xf32, #tpu.memory_space<vmem>>, %arg5: memref<4x1xf32, #tpu.memory_space<vmem>>, %arg6: memref<2x4x256xf32, #tpu.memory_space<vmem>>) attributes {dimension_semantics = [#tpu.dimension_semantics<arbitrary>], iteration_bounds = array<i64: 1>, scalar_prefetch = 0 : i64, scratch_operands = 0 : i64, tpu.core_type = #tpu.core_type<tc>, window_params = [{pipeline_mode = #tpu.pipeline_mode<synchronous>, transform_indices = @transform_0, window_bounds = array<i64: 2, 4, 256>}, {pipeline_mode = #tpu.pipeline_mode<synchronous>, transform_indices = @transform_1, window_bounds = array<i64: 4, 4>}, {pipeline_mode = #tpu.pipeline_mode<synchronous>, transform_indices = @transform_2, window_bounds = array<i64: 4, 1>}, {pipeline_mode = #tpu.pipeline_mode<synchronous>, transform_indices = @transform_3, window_bounds = array<i64: 4, 4>}, {pipeline_mode = #tpu.pipeline_mode<synchronous>, transform_indices = @transform_4, window_bounds = array<i64: 4, 1>}, {pipeline_mode = #tpu.pipeline_mode<synchronous>, transform_indices = @transform_5, window_bounds = array<i64: 2, 4, 256>}]} {
    %c0 = arith.constant 0 : index
    %c0_0 = arith.constant 0 : index
    %c0_1 = arith.constant 0 : index
    %0 = vector.load %arg1[%c0, %c0_0, %c0_1] : memref<2x4x256xf32, #tpu.memory_space<vmem>>, vector<2x4x256xf32>
    %c0_2 = arith.constant 0 : index
    %c0_3 = arith.constant 0 : index
    %1 = vector.load %arg2[%c0_2, %c0_3] : memref<4x4xf32, #tpu.memory_space<vmem>>, vector<4x4xf32>
    %c0_4 = arith.constant 0 : index
    %c0_5 = arith.constant 0 : index
    %2 = vector.load %arg3[%c0_4, %c0_5] : memref<4x1xf32, #tpu.memory_space<vmem>>, vector<4x1xf32>
    %c0_6 = arith.constant 0 : index
    %c0_7 = arith.constant 0 : index
    %3 = vector.load %arg4[%c0_6, %c0_7] : memref<4x4xf32, #tpu.memory_space<vmem>>, vector<4x4xf32>
    %c0_8 = arith.constant 0 : index
    %c0_9 = arith.constant 0 : index
    %4 = vector.load %arg5[%c0_8, %c0_9] : memref<4x1xf32, #tpu.memory_space<vmem>>, vector<4x1xf32>
    %5 = vector.shape_cast %2 : vector<4x1xf32> to vector<1x4x1xf32>
    %6 = vector.extract_strided_slice %1 {offsets = [0, 0], sizes = [4, 1], strides = [1, 1]} : vector<4x4xf32> to vector<4x1xf32>
    %7 = vector.shape_cast %6 : vector<4x1xf32> to vector<1x4x1xf32>
    %8 = vector.extract_strided_slice %0 {offsets = [0, 0, 0], sizes = [2, 1, 256], strides = [1, 1, 1]} : vector<2x4x256xf32> to vector<2x1x256xf32>
    %9 = vector.broadcast %7 : vector<1x4x1xf32> to vector<2x4x256xf32>
    %10 = vector.broadcast %8 : vector<2x1x256xf32> to vector<2x4x256xf32>
    %11 = arith.mulf %9, %10 : vector<2x4x256xf32>
    %12 = vector.broadcast %5 : vector<1x4x1xf32> to vector<2x4x256xf32>
    %13 = arith.addf %12, %11 : vector<2x4x256xf32>
    %14 = vector.extract_strided_slice %1 {offsets = [0, 1], sizes = [4, 1], strides = [1, 1]} : vector<4x4xf32> to vector<4x1xf32>
    %15 = vector.shape_cast %14 : vector<4x1xf32> to vector<1x4x1xf32>
    %16 = vector.extract_strided_slice %0 {offsets = [0, 1, 0], sizes = [2, 1, 256], strides = [1, 1, 1]} : vector<2x4x256xf32> to vector<2x1x256xf32>
    %17 = vector.broadcast %15 : vector<1x4x1xf32> to vector<2x4x256xf32>
    %18 = vector.broadcast %16 : vector<2x1x256xf32> to vector<2x4x256xf32>
    %19 = arith.mulf %17, %18 : vector<2x4x256xf32>
    %20 = arith.addf %13, %19 : vector<2x4x256xf32>
    %21 = vector.extract_strided_slice %1 {offsets = [0, 2], sizes = [4, 1], strides = [1, 1]} : vector<4x4xf32> to vector<4x1xf32>
    %22 = vector.shape_cast %21 : vector<4x1xf32> to vector<1x4x1xf32>
    %23 = vector.extract_strided_slice %0 {offsets = [0, 2, 0], sizes = [2, 1, 256], strides = [1, 1, 1]} : vector<2x4x256xf32> to vector<2x1x256xf32>
    %24 = vector.broadcast %22 : vector<1x4x1xf32> to vector<2x4x256xf32>
    %25 = vector.broadcast %23 : vector<2x1x256xf32> to vector<2x4x256xf32>
    %26 = arith.mulf %24, %25 : vector<2x4x256xf32>
    %27 = arith.addf %20, %26 : vector<2x4x256xf32>
    %28 = vector.extract_strided_slice %1 {offsets = [0, 3], sizes = [4, 1], strides = [1, 1]} : vector<4x4xf32> to vector<4x1xf32>
    %29 = vector.shape_cast %28 : vector<4x1xf32> to vector<1x4x1xf32>
    %30 = vector.extract_strided_slice %0 {offsets = [0, 3, 0], sizes = [2, 1, 256], strides = [1, 1, 1]} : vector<2x4x256xf32> to vector<2x1x256xf32>
    %31 = vector.broadcast %29 : vector<1x4x1xf32> to vector<2x4x256xf32>
    %32 = vector.broadcast %30 : vector<2x1x256xf32> to vector<2x4x256xf32>
    %33 = arith.mulf %31, %32 : vector<2x4x256xf32>
    %34 = arith.addf %27, %33 : vector<2x4x256xf32>
    %cst = arith.constant dense<0.000000e+00> : vector<2x4xf32>
    %35 = vector.multi_reduction <add>, %34, %cst [2] : vector<2x4x256xf32> to vector<2x4xf32>
    %36 = vector.shape_cast %35 : vector<2x4xf32> to vector<2x4x1xf32>
    %37 = arith.mulf %34, %34 : vector<2x4x256xf32>
    %cst_10 = arith.constant dense<0.000000e+00> : vector<2x4xf32>
    %38 = vector.multi_reduction <add>, %37, %cst_10 [2] : vector<2x4x256xf32> to vector<2x4xf32>
    %39 = vector.shape_cast %38 : vector<2x4xf32> to vector<2x4x1xf32>
    %cst_11 = arith.constant 3.906250e-03 : f32
    %40 = vector.broadcast %cst_11 : f32 to vector<2x4x1xf32>
    %41 = arith.mulf %36, %40 : vector<2x4x1xf32>
    %cst_12 = arith.constant 3.906250e-03 : f32
    %42 = vector.broadcast %cst_12 : f32 to vector<2x4x1xf32>
    %43 = arith.mulf %39, %42 : vector<2x4x1xf32>
    %44 = arith.mulf %41, %41 : vector<2x4x1xf32>
    %45 = arith.subf %43, %44 : vector<2x4x1xf32>
    %cst_13 = arith.constant 0.000000e+00 : f32
    %46 = vector.broadcast %cst_13 : f32 to vector<2x4x1xf32>
    %47 = arith.maximumf %45, %46 : vector<2x4x1xf32>
    %48 = vector.broadcast %41 : vector<2x4x1xf32> to vector<2x4x256xf32>
    %49 = arith.subf %34, %48 : vector<2x4x256xf32>
    %cst_14 = arith.constant 9.99999974E-6 : f32
    %50 = vector.broadcast %cst_14 : f32 to vector<2x4x1xf32>
    %51 = arith.addf %47, %50 : vector<2x4x1xf32>
    %52 = math.rsqrt %51 : vector<2x4x1xf32>
    %53 = vector.broadcast %52 : vector<2x4x1xf32> to vector<2x4x256xf32>
    %54 = arith.mulf %49, %53 : vector<2x4x256xf32>
    %cst_15 = arith.constant 0.000000e+00 : f32
    %55 = vector.broadcast %cst_15 : f32 to vector<2x4x256xf32>
    %56 = arith.maximumf %54, %55 : vector<2x4x256xf32>
    %57 = vector.shape_cast %4 : vector<4x1xf32> to vector<1x4x1xf32>
    %58 = vector.extract_strided_slice %3 {offsets = [0, 0], sizes = [4, 1], strides = [1, 1]} : vector<4x4xf32> to vector<4x1xf32>
    %59 = vector.shape_cast %58 : vector<4x1xf32> to vector<1x4x1xf32>
    %60 = vector.extract_strided_slice %56 {offsets = [0, 0, 0], sizes = [2, 1, 256], strides = [1, 1, 1]} : vector<2x4x256xf32> to vector<2x1x256xf32>
    %61 = vector.broadcast %59 : vector<1x4x1xf32> to vector<2x4x256xf32>
    %62 = vector.broadcast %60 : vector<2x1x256xf32> to vector<2x4x256xf32>
    %63 = arith.mulf %61, %62 : vector<2x4x256xf32>
    %64 = vector.broadcast %57 : vector<1x4x1xf32> to vector<2x4x256xf32>
    %65 = arith.addf %64, %63 : vector<2x4x256xf32>
    %66 = vector.extract_strided_slice %3 {offsets = [0, 1], sizes = [4, 1], strides = [1, 1]} : vector<4x4xf32> to vector<4x1xf32>
    %67 = vector.shape_cast %66 : vector<4x1xf32> to vector<1x4x1xf32>
    %68 = vector.extract_strided_slice %56 {offsets = [0, 1, 0], sizes = [2, 1, 256], strides = [1, 1, 1]} : vector<2x4x256xf32> to vector<2x1x256xf32>
    %69 = vector.broadcast %67 : vector<1x4x1xf32> to vector<2x4x256xf32>
    %70 = vector.broadcast %68 : vector<2x1x256xf32> to vector<2x4x256xf32>
    %71 = arith.mulf %69, %70 : vector<2x4x256xf32>
    %72 = arith.addf %65, %71 : vector<2x4x256xf32>
    %73 = vector.extract_strided_slice %3 {offsets = [0, 2], sizes = [4, 1], strides = [1, 1]} : vector<4x4xf32> to vector<4x1xf32>
    %74 = vector.shape_cast %73 : vector<4x1xf32> to vector<1x4x1xf32>
    %75 = vector.extract_strided_slice %56 {offsets = [0, 2, 0], sizes = [2, 1, 256], strides = [1, 1, 1]} : vector<2x4x256xf32> to vector<2x1x256xf32>
    %76 = vector.broadcast %74 : vector<1x4x1xf32> to vector<2x4x256xf32>
    %77 = vector.broadcast %75 : vector<2x1x256xf32> to vector<2x4x256xf32>
    %78 = arith.mulf %76, %77 : vector<2x4x256xf32>
    %79 = arith.addf %72, %78 : vector<2x4x256xf32>
    %80 = vector.extract_strided_slice %3 {offsets = [0, 3], sizes = [4, 1], strides = [1, 1]} : vector<4x4xf32> to vector<4x1xf32>
    %81 = vector.shape_cast %80 : vector<4x1xf32> to vector<1x4x1xf32>
    %82 = vector.extract_strided_slice %56 {offsets = [0, 3, 0], sizes = [2, 1, 256], strides = [1, 1, 1]} : vector<2x4x256xf32> to vector<2x1x256xf32>
    %83 = vector.broadcast %81 : vector<1x4x1xf32> to vector<2x4x256xf32>
    %84 = vector.broadcast %82 : vector<2x1x256xf32> to vector<2x4x256xf32>
    %85 = arith.mulf %83, %84 : vector<2x4x256xf32>
    %86 = arith.addf %79, %85 : vector<2x4x256xf32>
    %cst_16 = arith.constant dense<0.000000e+00> : vector<2x4xf32>
    %87 = vector.multi_reduction <add>, %86, %cst_16 [2] : vector<2x4x256xf32> to vector<2x4xf32>
    %88 = vector.shape_cast %87 : vector<2x4xf32> to vector<2x4x1xf32>
    %89 = arith.mulf %86, %86 : vector<2x4x256xf32>
    %cst_17 = arith.constant dense<0.000000e+00> : vector<2x4xf32>
    %90 = vector.multi_reduction <add>, %89, %cst_17 [2] : vector<2x4x256xf32> to vector<2x4xf32>
    %91 = vector.shape_cast %90 : vector<2x4xf32> to vector<2x4x1xf32>
    %cst_18 = arith.constant 3.906250e-03 : f32
    %92 = vector.broadcast %cst_18 : f32 to vector<2x4x1xf32>
    %93 = arith.mulf %88, %92 : vector<2x4x1xf32>
    %cst_19 = arith.constant 3.906250e-03 : f32
    %94 = vector.broadcast %cst_19 : f32 to vector<2x4x1xf32>
    %95 = arith.mulf %91, %94 : vector<2x4x1xf32>
    %96 = arith.mulf %93, %93 : vector<2x4x1xf32>
    %97 = arith.subf %95, %96 : vector<2x4x1xf32>
    %cst_20 = arith.constant 0.000000e+00 : f32
    %98 = vector.broadcast %cst_20 : f32 to vector<2x4x1xf32>
    %99 = arith.maximumf %97, %98 : vector<2x4x1xf32>
    %100 = vector.broadcast %93 : vector<2x4x1xf32> to vector<2x4x256xf32>
    %101 = arith.subf %86, %100 : vector<2x4x256xf32>
    %cst_21 = arith.constant 9.99999974E-6 : f32
    %102 = vector.broadcast %cst_21 : f32 to vector<2x4x1xf32>
    %103 = arith.addf %99, %102 : vector<2x4x1xf32>
    %104 = math.rsqrt %103 : vector<2x4x1xf32>
    %105 = vector.broadcast %104 : vector<2x4x1xf32> to vector<2x4x256xf32>
    %106 = arith.mulf %101, %105 : vector<2x4x256xf32>
    %107 = arith.addf %0, %106 : vector<2x4x256xf32>
    %c0_22 = arith.constant 0 : index
    %c0_23 = arith.constant 0 : index
    %c0_24 = arith.constant 0 : index
    %108 = vector.load %arg6[%c0_22, %c0_23, %c0_24] : memref<2x4x256xf32, #tpu.memory_space<vmem>>, vector<2x4x256xf32>
    tpu.vector_store %arg6[%c0_22, %c0_23, %c0_24], %107 {strides = array<i32>} : memref<2x4x256xf32, #tpu.memory_space<vmem>>, vector<2x4x256xf32>,
    return
  }
  func.func @transform_0(%arg0: i32) -> (i32, i32, i32) {
    %c0_i32 = arith.constant 0 : i32
    %c0_i32_0 = arith.constant 0 : i32
    %c0_i32_1 = arith.constant 0 : i32
    %c0_i32_2 = arith.constant 0 : i32
    return %c0_i32, %c0_i32_0, %c0_i32_1 : i32, i32, i32
  }
  func.func @transform_1(%arg0: i32) -> (i32, i32) {
    %c0_i32 = arith.constant 0 : i32
    %c0_i32_0 = arith.constant 0 : i32
    %c0_i32_1 = arith.constant 0 : i32
    return %c0_i32, %c0_i32_0 : i32, i32
  }
  func.func @transform_2(%arg0: i32) -> (i32, i32) {
    %c0_i32 = arith.constant 0 : i32
    %c0_i32_0 = arith.constant 0 : i32
    %c0_i32_1 = arith.constant 0 : i32
    return %c0_i32, %c0_i32_0 : i32, i32
  }
  func.func @transform_3(%arg0: i32) -> (i32, i32) {
    %c0_i32 = arith.constant 0 : i32
    %c0_i32_0 = arith.constant 0 : i32
    %c0_i32_1 = arith.constant 0 : i32
    return %c0_i32, %c0_i32_0 : i32, i32
  }
  func.func @transform_4(%arg0: i32) -> (i32, i32) {
    %c0_i32 = arith.constant 0 : i32
    %c0_i32_0 = arith.constant 0 : i32
    %c0_i32_1 = arith.constant 0 : i32
    return %c0_i32, %c0_i32_0 : i32, i32
  }
  func.func @transform_5(%arg0: i32) -> (i32, i32, i32) {
    %c0_i32 = arith.constant 0 : i32
    %c0_i32_0 = arith.constant 0 : i32
    %c0_i32_1 = arith.constant 0 : i32
    %c0_i32_2 = arith.constant 0 : i32
    return %c0_i32, %c0_i32_0, %c0_i32_1 : i32, i32, i32
  }
}

</mosaic_0001>

<llo_original>
// kernel: tpu_custom_call.1
$region0: #{tpu_custom_call.1}
  #allocation0 [shape = 'u32[]', space=smem, size = 0x4, offset = 0x4, fixed_abs, tag = 'smem constant byte address 0x4 - core index']
  #allocation1 [shape = 'u32[72,128]{1,0:T(1,128)}', space=vmem, size = 0x9000, scoped, tag = 'internal scratch']
  %s0 = inlined_call_operand.hbm [shape: f32[2,4,256], index: 0, kind: input, shape index: {}]
  %s1 = inlined_call_operand.vmem [shape: f32[4,4], index: 1, kind: input, shape index: {}]
  %s2 = inlined_call_operand.vmem [shape: f32[4,1], index: 2, kind: input, shape index: {}]
  %s3 = inlined_call_operand.vmem [shape: f32[4,4], index: 3, kind: input, shape index: {}]
  %s4 = inlined_call_operand.vmem [shape: f32[4,1], index: 4, kind: input, shape index: {}]
  %s5 = inlined_call_operand.hbm [shape: f32[2,4,256], index: 5, kind: output, shape index: {}]
  %s6 = sld [smem:[#allocation0]]
  $region34: #{tpu_custom_call.1} parent=0
    _
  %s8 = ssub.s32 1, %s6
  %s9 = scalar_select 0, %s8, %s6
  $region1: #{tpu_custom_call.1} parent=0
    #allocation2 [shape = 'u8[8192]{0}', space=vmem, size = 0x2000, scoped, tag = 'input window, operand 0, single buffered']
    #allocation3 [shape = 's32[1]{0}', space=sflag, size = 0x4, scoped, tag = 'scoped memory for tpu_custom_call.1']
    #allocation4 [shape = 's32[1]{0}', space=sflag, size = 0x4, scoped, tag = 'scoped memory for tpu_custom_call.1']
    #allocation5 [shape = 'u8[8192]{0}', space=vmem, size = 0x2000, scoped, tag = 'output window, operand 0, single buffered']
    %10 = vsyncpa [#allocation3], 0
    %11 = vsyncpa [#allocation4], 0
    // Predicated region
    $region2: #{tpu_custom_call.1} parent=1 // pred_check
      _
    $region3: #{tpu_custom_call.1} parent=1 // pred_check_branch
      %13 = sbr.rel (0) target = $region5
    $region4: #{tpu_custom_call.1} parent=1 // pred_region
      %15 = vsyncadd [#allocation3], 0
      %s16 = sshll.u32 %s0, 4
      %s17 = int_to_ptr.hbm [resolvable:$true] %s16
      %s18 = sshll.u32 [#allocation2], 4
      %s19 = int_to_ptr.vmem [resolvable:$true] %s18
      %24 = dma.hbm_to_vmem [thread:$0]  %s17, 256, %s19, [#allocation3], 128, 128, 8
    $region5: #{tpu_custom_call.1} parent=1 // pred_fallthru
      _
    // Predicated region
    $region6: #{tpu_custom_call.1} parent=1 // pred_check
      _
    $region7: #{tpu_custom_call.1} parent=1 // pred_check_branch
      %26 = sbr.rel (0) target = $region9
    $region8: #{tpu_custom_call.1} parent=1 // pred_region
      _
    $region9: #{tpu_custom_call.1} parent=1 // pred_fallthru
      _
    // Predicated region
    $region10: #{tpu_custom_call.1} parent=1 // pred_check
      _
    $region11: #{tpu_custom_call.1} parent=1 // pred_check_branch
      %28 = sbr.rel (0) target = $region13
    $region12: #{tpu_custom_call.1} parent=1 // pred_region
      _
    $region13: #{tpu_custom_call.1} parent=1 // pred_fallthru
      _
    // Predicated region
    $region14: #{tpu_custom_call.1} parent=1 // pred_check
      _
    $region15: #{tpu_custom_call.1} parent=1 // pred_check_branch
      %30 = sbr.rel (0) target = $region17
    $region16: #{tpu_custom_call.1} parent=1 // pred_region
      _
    $region17: #{tpu_custom_call.1} parent=1 // pred_fallthru
      _
    // Predicated region
    $region18: #{tpu_custom_call.1} parent=1 // pred_check
      _
    $region19: #{tpu_custom_call.1} parent=1 // pred_check_branch
      %32 = sbr.rel (0) target = $region21
    $region20: #{tpu_custom_call.1} parent=1 // pred_region
      _
    $region21: #{tpu_custom_call.1} parent=1 // pred_fallthru
      _
    // Predicated region
    $region22: #{tpu_custom_call.1} parent=1 // pred_check
      _
    $region23: #{tpu_custom_call.1} parent=1 // pred_check_branch
      %34 = sbr.rel (0) target = $region25
    $region24: #{tpu_custom_call.1} parent=1 // pred_region
      %36 = dma.done [#allocation3], 256
    $region25: #{tpu_custom_call.1} parent=1 // pred_fallthru
      _
    %v37 = vld [vmem:[#allocation2] sm:$0xff]
    %v38 = vld [vmem:[#allocation2 + $0x8] sm:$0xff]
    %v39 = vld [vmem:[%s1] sm:$0xf]
    %v40 = vld [vmem:[%s2] sm:$0xf]
    %v41 = vld [vmem:[%s3] sm:$0xf]
    %v42 = vld [vmem:[%s4] sm:$0xf]
    %44 = vset.pattern.permute.xlu0 0
    %45 = vperm.xlu0 %44, %v39
    %v46 = vpop.permute.xlu0 %45
    %v50 = vperm.slane %v37, 0
    %v51 = vperm.slane %v37, 4
    %v52 = vperm.slane %v38, 0
    %v53 = vperm.slane %v38, 4
    %v58 = vperm.slane %v50, 0
    %v59 = vperm.slane %v51, 0
    %v60 = vperm.slane %v52, 0
    %v61 = vperm.slane %v53, 0
    %v62 = vmul.f32 %v46, %v58
    %v63 = vmul.f32 %v46, %v59
    %v64 = vmul.f32 %v46, %v60
    %v65 = vmul.f32 %v46, %v61
    %67 = vset.pattern.permute.xlu0 0
    %68 = vperm.xlu0 %67, %v40
    %v69 = vpop.permute.xlu0 %68
    %v71 = vadd.f32 %v69, %v62
    %v72 = vadd.f32 %v69, %v63
    %v73 = vadd.f32 %v69, %v64
    %v74 = vadd.f32 %v69, %v65
    %75 = vset.pattern.permute.xlu0 1
    %76 = vperm.xlu0 %75, %v39
    %v77 = vpop.permute.xlu0 %76
    %v79 = vperm.slane %v37, 1
    %v80 = vperm.slane %v37, 5
    %v81 = vperm.slane %v38, 1
    %v82 = vperm.slane %v38, 5
    %v87 = vperm.slane %v79, 1
    %v88 = vperm.slane %v80, 1
    %v89 = vperm.slane %v81, 1
    %v90 = vperm.slane %v82, 1
    %v91 = vmul.f32 %v77, %v87
    %v92 = vmul.f32 %v77, %v88
    %v93 = vmul.f32 %v77, %v89
    %v94 = vmul.f32 %v77, %v90
    %v95 = vadd.f32 %v71, %v91
    %v96 = vadd.f32 %v72, %v92
    %v97 = vadd.f32 %v73, %v93
    %v98 = vadd.f32 %v74, %v94
    %99 = vset.pattern.permute.xlu0 2
    %100 = vperm.xlu0 %99, %v39
    %v101 = vpop.permute.xlu0 %100
    %v103 = vperm.slane %v37, 2
    %v104 = vperm.slane %v37, 6
    %v105 = vperm.slane %v38, 2
    %v106 = vperm.slane %v38, 6
    %v111 = vperm.slane %v103, 2
    %v112 = vperm.slane %v104, 2
    %v113 = vperm.slane %v105, 2
    %v114 = vperm.slane %v106, 2
    %v115 = vmul.f32 %v101, %v111
    %v116 = vmul.f32 %v101, %v112
    %v117 = vmul.f32 %v101, %v113
    %v118 = vmul.f32 %v101, %v114
    %v119 = vadd.f32 %v95, %v115
    %v120 = vadd.f32 %v96, %v116
    %v121 = vadd.f32 %v97, %v117
    %v122 = vadd.f32 %v98, %v118
    %123 = vset.pattern.permute.xlu0 3
    %124 = vperm.xlu0 %123, %v39
    %v125 = vpop.permute.xlu0 %124
    %v127 = vperm.slane %v37, 3
    %v128 = vperm.slane %v37, 7
    %v129 = vperm.slane %v38, 3
    %v130 = vperm.slane %v38, 7
    %v135 = vperm.slane %v127, 3
    %v136 = vperm.slane %v128, 3
    %v137 = vperm.slane %v129, 3
    %v138 = vperm.slane %v130, 3
    %v139 = vmul.f32 %v125, %v135
    %v140 = vmul.f32 %v125, %v136
    %v141 = vmul.f32 %v125, %v137
    %v142 = vmul.f32 %v125, %v138
    %v143 = vadd.f32 %v119, %v139
    %v144 = vadd.f32 %v120, %v140
    %v145 = vadd.f32 %v121, %v141
    %v146 = vadd.f32 %v122, %v142
    %vm147 = vcmask 1043456
    %v148 = vsel %vm147, %v143, 0.0
    %v149 = vsel %vm147, %v144, 0.0
    %v150 = vadd.f32 %v148, %v149
    %151 = vadd.xlane.f32.xlu0 %v150
    %v152 = vpop.xlane.xlu0 %151
    %v153 = vsel %vm147, %v145, 0.0
    %v154 = vsel %vm147, %v146, 0.0
    %v155 = vadd.f32 %v153, %v154
    %156 = vadd.xlane.f32.xlu0 %v155
    %v157 = vpop.xlane.xlu0 %156
    %v158 = vmul.f32 %v143, %v143
    %v159 = vmul.f32 %v144, %v144
    %v160 = vmul.f32 %v145, %v145
    %v161 = vmul.f32 %v146, %v146
    %v162 = vsel %vm147, %v158, 0.0
    %v163 = vsel %vm147, %v159, 0.0
    %v164 = vadd.f32 %v162, %v163
    %165 = vadd.xlane.f32.xlu0 %v164
    %v166 = vpop.xlane.xlu0 %165
    %v167 = vsel %vm147, %v160, 0.0
    %v168 = vsel %vm147, %v161, 0.0
    %v169 = vadd.f32 %v167, %v168
    %170 = vadd.xlane.f32.xlu0 %v169
    %v171 = vpop.xlane.xlu0 %170
    %v172 = vmul.f32 %v152, 0.00390625
    %v173 = vmul.f32 %v157, 0.00390625
    %v174 = vmul.f32 %v166, 0.00390625
    %v175 = vmul.f32 %v171, 0.00390625
    %v176 = vmul.f32 %v172, %v172
    %v177 = vmul.f32 %v173, %v173
    %v178 = vsub.f32 %v174, %v176
    %v179 = vsub.f32 %v175, %v177
    %v180 = vmax.f32 %v178, 0.0
    %v181 = vmax.f32 %v179, 0.0
    %v182 = vsub.f32 %v143, %v172
    %v183 = vsub.f32 %v144, %v172
    %v184 = vsub.f32 %v145, %v173
    %v185 = vsub.f32 %v146, %v173
    %v186 = vadd.f32 %v180, 1e-05
    %v187 = vadd.f32 %v181, 1e-05
    %v188 = vrsqrt.pop %v186
    %v189 = vmul.f32 %v188, %v186
    %v190 = vmul.f32 %v189, %v188
    %v191 = vmul.f32 0.5, %v190
    %v192 = vsub.f32 1.5, %v191
    %v193 = vmul.f32 %v188, %v192
    %vm194 = vweird.f32 %v186
    %vm195 = vweird.f32 %v188
    %vm196 = vmor %vm194, %vm195
    %v197 = vsel %vm196, %v188, %v193
    %v198 = vrsqrt.pop %v187
    %v199 = vmul.f32 %v198, %v187
    %v200 = vmul.f32 %v199, %v198
    %v201 = vmul.f32 0.5, %v200
    %v202 = vsub.f32 1.5, %v201
    %v203 = vmul.f32 %v198, %v202
    %vm204 = vweird.f32 %v187
    %vm205 = vweird.f32 %v198
    %vm206 = vmor %vm204, %vm205
    %v207 = vsel %vm206, %v198, %v203
    %v208 = vmul.f32 %v182, %v197
    %v209 = vmul.f32 %v183, %v197
    %v210 = vmul.f32 %v184, %v207
    %v211 = vmul.f32 %v185, %v207
    %v212 = vmax.f32 %v208, 0.0
    %v213 = vmax.f32 %v209, 0.0
    %v214 = vmax.f32 %v210, 0.0
    %v215 = vmax.f32 %v211, 0.0
    %217 = vset.pattern.permute.xlu0 0
    %218 = vperm.xlu0 %217, %v41
    %v219 = vpop.permute.xlu0 %218
    %v221 = vperm.slane %v212, 0
    %v222 = vperm.slane %v213, 0
    %v223 = vperm.slane %v214, 0
    %v224 = vperm.slane %v215, 0
    %v225 = vmul.f32 %v219, %v221
    %v226 = vmul.f32 %v219, %v222
    %v227 = vmul.f32 %v219, %v223
    %v228 = vmul.f32 %v219, %v224
    %230 = vset.pattern.permute.xlu0 0
    %231 = vperm.xlu0 %230, %v42
    %v232 = vpop.permute.xlu0 %231
    %v234 = vadd.f32 %v232, %v225
    %v235 = vadd.f32 %v232, %v226
    %v236 = vadd.f32 %v232, %v227
    %v237 = vadd.f32 %v232, %v228
    %238 = vset.pattern.permute.xlu0 1
    %239 = vperm.xlu0 %238, %v41
    %v240 = vpop.permute.xlu0 %239
    %v242 = vperm.slane %v212, 1
    %v243 = vperm.slane %v213, 1
    %v244 = vperm.slane %v214, 1
    %v245 = vperm.slane %v215, 1
    %v246 = vmul.f32 %v240, %v242
    %v247 = vmul.f32 %v240, %v243
    %v248 = vmul.f32 %v240, %v244
    %v249 = vmul.f32 %v240, %v245
    %v250 = vadd.f32 %v234, %v246
    %v251 = vadd.f32 %v235, %v247
    %v252 = vadd.f32 %v236, %v248
    %v253 = vadd.f32 %v237, %v249
    %254 = vset.pattern.permute.xlu0 2
    %255 = vperm.xlu0 %254, %v41
    %v256 = vpop.permute.xlu0 %255
    %v258 = vperm.slane %v212, 2
    %v259 = vperm.slane %v213, 2
    %v260 = vperm.slane %v214, 2
    %v261 = vperm.slane %v215, 2
    %v262 = vmul.f32 %v256, %v258
    %v263 = vmul.f32 %v256, %v259
    %v264 = vmul.f32 %v256, %v260
    %v265 = vmul.f32 %v256, %v261
    %v266 = vadd.f32 %v250, %v262
    %v267 = vadd.f32 %v251, %v263
    %v268 = vadd.f32 %v252, %v264
    %v269 = vadd.f32 %v253, %v265
    %270 = vset.pattern.permute.xlu0 3
    %271 = vperm.xlu0 %270, %v41
    %v272 = vpop.permute.xlu0 %271
    %v274 = vperm.slane %v212, 3
    %v275 = vperm.slane %v213, 3
    %v276 = vperm.slane %v214, 3
    %v277 = vperm.slane %v215, 3
    %v278 = vmul.f32 %v272, %v274
    %v279 = vmul.f32 %v272, %v275
    %v280 = vmul.f32 %v272, %v276
    %v281 = vmul.f32 %v272, %v277
    %v282 = vadd.f32 %v266, %v278
    %v283 = vadd.f32 %v267, %v279
    %v284 = vadd.f32 %v268, %v280
    %v285 = vadd.f32 %v269, %v281
    %v286 = vsel %vm147, %v282, 0.0
    %v287 = vsel %vm147, %v283, 0.0
    %v288 = vadd.f32 %v286, %v287
    %289 = vadd.xlane.f32.xlu0 %v288
    %v290 = vpop.xlane.xlu0 %289
    %v291 = vsel %vm147, %v284, 0.0
    %v292 = vsel %vm147, %v285, 0.0
    %v293 = vadd.f32 %v291, %v292
    %294 = vadd.xlane.f32.xlu0 %v293
    %v295 = vpop.xlane.xlu0 %294
    %v296 = vmul.f32 %v282, %v282
    %v297 = vmul.f32 %v283, %v283
    %v298 = vmul.f32 %v284, %v284
    %v299 = vmul.f32 %v285, %v285
    %v300 = vsel %vm147, %v296, 0.0
    %v301 = vsel %vm147, %v297, 0.0
    %v302 = vadd.f32 %v300, %v301
    %303 = vadd.xlane.f32.xlu0 %v302
    %v304 = vpop.xlane.xlu0 %303
    %v305 = vsel %vm147, %v298, 0.0
    %v306 = vsel %vm147, %v299, 0.0
    %v307 = vadd.f32 %v305, %v306
    %308 = vadd.xlane.f32.xlu0 %v307
    %v309 = vpop.xlane.xlu0 %308
    %v310 = vmul.f32 %v290, 0.00390625
    %v311 = vmul.f32 %v295, 0.00390625
    %v312 = vmul.f32 %v304, 0.00390625
    %v313 = vmul.f32 %v309, 0.00390625
    %v314 = vmul.f32 %v310, %v310
    %v315 = vmul.f32 %v311, %v311
    %v316 = vsub.f32 %v312, %v314
    %v317 = vsub.f32 %v313, %v315
    %v318 = vmax.f32 %v316, 0.0
    %v319 = vmax.f32 %v317, 0.0
    %v320 = vsub.f32 %v282, %v310
    %v321 = vsub.f32 %v283, %v310
    %v322 = vsub.f32 %v284, %v311
    %v323 = vsub.f32 %v285, %v311
    %v324 = vadd.f32 %v318, 1e-05
    %v325 = vadd.f32 %v319, 1e-05
    %v326 = vrsqrt.pop %v324
    %v327 = vmul.f32 %v326, %v324
    %v328 = vmul.f32 %v327, %v326
    %v329 = vmul.f32 0.5, %v328
    %v330 = vsub.f32 1.5, %v329
    %v331 = vmul.f32 %v326, %v330
    %vm332 = vweird.f32 %v324
    %vm333 = vweird.f32 %v326
    %vm334 = vmor %vm332, %vm333
    %v335 = vsel %vm334, %v326, %v331
    %v336 = vrsqrt.pop %v325
    %v337 = vmul.f32 %v336, %v325
    %v338 = vmul.f32 %v337, %v336
    %v339 = vmul.f32 0.5, %v338
    %v340 = vsub.f32 1.5, %v339
    %v341 = vmul.f32 %v336, %v340
    %vm342 = vweird.f32 %v325
    %vm343 = vweird.f32 %v336
    %vm344 = vmor %vm342, %vm343
    %v345 = vsel %vm344, %v336, %v341
    %v346 = vmul.f32 %v320, %v335
    %v347 = vmul.f32 %v321, %v335
    %v348 = vmul.f32 %v322, %v345
    %v349 = vmul.f32 %v323, %v345
    %v354 = vrot.slane %v347, 4
    %v355 = vrot.slane %v349, 4
    %v356 = vsel %vm147, %v346, %v354
    %v357 = vsel %vm147, %v348, %v355
    %v360 = vadd.f32 %v37, %v356
    %v361 = vadd.f32 %v38, %v357
    %362 = vst [vmem:[#allocation5] sm:$0xff] %v360
    %363 = vst [vmem:[#allocation5 + $0x8] sm:$0xff] %v361
    // Predicated region
    $region26: #{tpu_custom_call.1} parent=1 // pred_check
      _
    $region27: #{tpu_custom_call.1} parent=1 // pred_check_branch
      %365 = sbr.rel (0) target = $region29
    $region28: #{tpu_custom_call.1} parent=1 // pred_region
      %367 = vsyncadd [#allocation4], 0
      %s368 = sshll.u32 [#allocation5], 4
      %s369 = int_to_ptr.vmem [resolvable:$true] %s368
      %s370 = sshll.u32 %s5, 4
      %s371 = int_to_ptr.hbm [resolvable:$true] %s370
      %376 = dma.vmem_to_hbm [thread:$0]  %s369, 256, %s371, [#allocation4], 128, 128, 8
    $region29: #{tpu_custom_call.1} parent=1 // pred_fallthru
      _
    // Predicated region
    $region30: #{tpu_custom_call.1} parent=1 // pred_check
      _
    $region31: #{tpu_custom_call.1} parent=1 // pred_check_branch
      %378 = sbr.rel (0) target = $region33
    $region32: #{tpu_custom_call.1} parent=1 // pred_region
      %380 = dma.done [#allocation4], 256
    $region33: #{tpu_custom_call.1} parent=1 // pred_fallthru
      _
    %381 = vsyncpa [#allocation3], 1
    %382 = vsyncpa [#allocation4], 1

</llo_original>
